<compile_context>
chip_gen: v7x
topology: tpu7x:2x2x1
jax: 0.10.0
libtpu: 0.0.40
codegen_flags: <defaults>
</compile_context>

<pallas_src>
import functools

import jax
import jax.numpy as jnp
from jax.experimental import pallas as pl
from jax.experimental.pallas import tpu as pltpu


_VPU_UNROLL_LIMIT = 2048        # max C_out * C_in_fused for the unrolled FMA path
_TARGET_STEP_BYTES = 2 << 20    # aim for >= ~2 MiB of feature traffic per grid step


def _cdiv(a, b):
    return -(-a // b)


def _round_up(x, m):
    return _cdiv(x, m) * m


def _vmem_plan():
    """Generation-aware VMEM budget (tile estimate) and scoped-VMEM limit."""
    try:
        cap = int(pltpu.get_tpu_info().vmem_capacity_bytes)
    except Exception:
        cap = 64 << 20          # conservative default: v7x per-TensorCore VMEM
    budget = cap // 2           # what the tile-size estimate may consume
    limit = min(int(cap * 0.8), 112 << 20)
    return budget, limit


# ---------------------------------------------------------------------------
# Kernels
# ---------------------------------------------------------------------------

def _fuser_kernel_vpu(w_ref, b_ref, f1_ref, f2_ref, o_ref, *,
                      fusion_type, c_in, c_out):
    """Small-channel path: unrolled VPU broadcast-FMA, SMEM scalar weights.

    f1_ref / f2_ref : (BN, C, TS128, 128)      VMEM (dense per-channel slabs)
    o_ref           : (BN, C_out, TS128, 128)  VMEM
    w_ref           : (C_out, C_in_fused)      SMEM (f32)
    b_ref           : (C_out,)                 SMEM (f32)
    """
    f1 = f1_ref[...]
    f2 = f2_ref[...]

    if fusion_type == "add":
        terms = [(f1 + f2, 0)]
    elif fusion_type == "multiply":
        terms = [(f1 * f2, 0)]
    elif fusion_type == "concat":
        # concat along channels == split contraction over W[:, :C] / W[:, C:]
        terms = [(f1, 0), (f2, c_in)]
    else:
        raise ValueError("Invalid fusion type.")

    bn, _, ts128, lanes = o_ref.shape
    for o in range(c_out):
        acc = jnp.zeros((bn, ts128, lanes), jnp.float32)
        for data, off in terms:
            for c in range(c_in):
                # scalar (SMEM) * dense slab: VPU FMA with f32 accumulation.
                acc = acc + w_ref[o, off + c] * data[:, c]
        acc = acc + b_ref[o]
        o_ref[:, o:o + 1] = jnp.expand_dims(acc, 1).astype(o_ref.dtype)


def _fuser_kernel_mxu(w_ref, b_ref, f1_ref, f2_ref, o_ref, *,
                      fusion_type, c_in):
    """Large-channel fallback: lane-dense MXU matmul W @ X.

    f1_ref / f2_ref : (1, C, TS)         VMEM
    o_ref           : (1, C_out, TS)     VMEM
    w_ref           : (C_out, C_in_fused) VMEM (resident across grid)
    b_ref           : (C_out, 1)          VMEM (resident across grid)
    """
    f1 = f1_ref[0].astype(jnp.float32)
    f2 = f2_ref[0].astype(jnp.float32)
    w = w_ref[...].astype(jnp.float32)

    if fusion_type == "add":
        terms = [(f1 + f2, w)]
    elif fusion_type == "multiply":
        terms = [(f1 * f2, w)]
    elif fusion_type == "concat":
        terms = [(f1, w[:, :c_in]), (f2, w[:, c_in:])]
    else:
        raise ValueError("Invalid fusion type.")

    acc = jnp.zeros((o_ref.shape[1], o_ref.shape[2]), jnp.float32)
    for data, wsl in terms:
        acc = acc + jnp.dot(wsl, data, preferred_element_type=jnp.float32)
    acc = acc + b_ref[...].astype(jnp.float32)
    o_ref[0] = acc.astype(o_ref.dtype)


# ---------------------------------------------------------------------------
# Wrapper
# ---------------------------------------------------------------------------

def lightweight_fuser(feat1, feat2, weight, bias, *, fusion_type="add"):
    """feat1, feat2: (N, C, H, W).  weight: (C_out, C_in_fused, 1, 1).  bias: (C_out,)."""
    if fusion_type not in ("add", "multiply", "concat"):
        raise ValueError(
            "Invalid fusion type. Choose from 'add', 'multiply', or 'concat'.")
    if feat1.shape != feat2.shape:
        raise ValueError("feat1 and feat2 must have identical shapes.")

    N, C, H, W = feat1.shape
    C_out, C_in_fused = weight.shape[0], weight.shape[1]
    expected_cin = 2 * C if fusion_type == "concat" else C
    if C_in_fused != expected_cin:
        raise ValueError(
            f"weight has {C_in_fused} input channels but fusion_type="
            f"'{fusion_type}' with C={C} requires {expected_cin}.")
    if bias.shape[0] != C_out:
        raise ValueError("bias / weight output-channel mismatch.")

    S = H * W
    itemsize = jnp.dtype(feat1.dtype).itemsize
    vmem_budget, vmem_limit = _vmem_plan()

    # -----------------------------------------------------------------------
    # Small-channel path (the module's intended regime).
    # -----------------------------------------------------------------------
    if C_out * C_in_fused <= _VPU_UNROLL_LIMIT:
        S_pad = _round_up(S, 128)
        S128 = S_pad // 128

        f1 = feat1.reshape(N, C, S)
        f2 = feat2.reshape(N, C, S)
        if S_pad != S:
            pad = ((0, 0), (0, 0), (0, S_pad - S))
            f1 = jnp.pad(f1, pad)
            f2 = jnp.pad(f2, pad)
        f1 = f1.reshape(N, C, S128, 128)   # dense (sublane, lane) per channel
        f2 = f2.reshape(N, C, S128, 128)
        w_smem = weight.reshape(C_out, C_in_fused).astype(jnp.float32)
        b_smem = bias.reshape(C_out).astype(jnp.float32)

        def feat_bytes(bn, ts128):
            return bn * (2 * C + C_out) * ts128 * 128 * itemsize

        def vmem_bytes(bn, ts128):
            ts = ts128 * 128
            io = 2 * bn * ts * itemsize * (2 * C + C_out)   # double-buffered blocks
            tmp = bn * ts * 4 * (2 * C + 2)                 # f32 fuse temps + accumulator
            return io + tmp + (64 << 10)

        # Spatial tile: multiples of 8 sublanes (1024 lanes) or the full extent.
        if S128 <= 8:
            ts128 = S128
        else:
            ts128 = 8
            while ts128 < S128 and feat_bytes(1, ts128) < _TARGET_STEP_BYTES:
                nxt = min(ts128 * 2, S128)
                if nxt != S128:
                    nxt = (nxt // 8) * 8
                if nxt == ts128 or vmem_bytes(1, nxt) > vmem_budget:
                    break
                ts128 = nxt
        # Batch block: grow once the spatial axis is exhausted / target unmet.
        bn = 1
        while bn < N and feat_bytes(bn, ts128) < _TARGET_STEP_BYTES:
            nxt = min(bn * 2, N)
            if nxt == bn or vmem_bytes(nxt, ts128) > vmem_budget:
                break
            bn = nxt
        # v7x megacore: keep at least 2 grid steps when the problem allows it.
        if _cdiv(N, bn) * _cdiv(S128, ts128) < 2:
            if N >= 2:
                bn = _cdiv(N, 2)
            elif S128 > 8:
                half = _round_up(_cdiv(S128, 2), 8)
                if half < S128:
                    ts128 = half

        grid = (_cdiv(N, bn), _cdiv(S128, ts128))
        kernel = functools.partial(_fuser_kernel_vpu, fusion_type=fusion_type,
                                   c_in=C, c_out=C_out)
        out = pl.pallas_call(
            kernel,
            out_shape=jax.ShapeDtypeStruct((N, C_out, S128, 128), feat1.dtype),
            grid_spec=pltpu.PrefetchScalarGridSpec(
                num_scalar_prefetch=0,
                grid=grid,
                in_specs=[
                    pl.BlockSpec(memory_space=pltpu.MemorySpace.SMEM),  # weight
                    pl.BlockSpec(memory_space=pltpu.MemorySpace.SMEM),  # bias
                    pl.BlockSpec((bn, C, ts128, 128), lambda n, s: (n, 0, s, 0)),
                    pl.BlockSpec((bn, C, ts128, 128), lambda n, s: (n, 0, s, 0)),
                ],
                out_specs=pl.BlockSpec((bn, C_out, ts128, 128),
                                       lambda n, s: (n, 0, s, 0)),
            ),
            compiler_params=pltpu.CompilerParams(
                dimension_semantics=("parallel", "parallel"),
                vmem_limit_bytes=vmem_limit),
        )(w_smem, b_smem, f1, f2)

        out = out.reshape(N, C_out, S_pad)
        if S_pad != S:
            out = out[:, :, :S]
        return out.reshape(N, C_out, H, W)

    # -----------------------------------------------------------------------
    # Large-channel fallback: MXU matmul; channels are sublane-dense already.
    # -----------------------------------------------------------------------
    f1 = feat1.reshape(N, C, S)
    f2 = feat2.reshape(N, C, S)
    w_mat = weight.reshape(C_out, C_in_fused)
    b_col = bias.reshape(C_out, 1)

    def feat_bytes_l(ts):
        return (2 * C + C_out) * ts * itemsize

    def vmem_bytes_l(ts):
        io = 2 * ts * itemsize * (2 * C + C_out)
        tmp = ts * 4 * (3 * C + C_out)                # f32 upcasts + fused + acc
        wb = 2 * C_out * (C_in_fused + 1) * 4
        return io + tmp + wb + (64 << 10)

    if S <= 128:
        ts = S
    else:
        ts = 128
        while ts < S and feat_bytes_l(ts) < _TARGET_STEP_BYTES:
            nxt = min(ts * 2, S)
            if nxt != S:
                nxt = (nxt // 128) * 128
            if nxt == ts or vmem_bytes_l(nxt) > vmem_budget:
                break
            ts = nxt
    if N * _cdiv(S, ts) < 2 and S > 128:              # v7x megacore split
        half = _round_up(_cdiv(S, 2), 128)
        if half < S:
            ts = half

    grid = (N, _cdiv(S, ts))
    kernel = functools.partial(_fuser_kernel_mxu, fusion_type=fusion_type, c_in=C)
    out = pl.pallas_call(
        kernel,
        out_shape=jax.ShapeDtypeStruct((N, C_out, S), feat1.dtype),
        grid_spec=pltpu.PrefetchScalarGridSpec(
            num_scalar_prefetch=0,
            grid=grid,
            in_specs=[
                pl.BlockSpec((C_out, C_in_fused), lambda n, s: (0, 0)),
                pl.BlockSpec((C_out, 1), lambda n, s: (0, 0)),
                pl.BlockSpec((1, C, ts), lambda n, s: (n, 0, s)),
                pl.BlockSpec((1, C, ts), lambda n, s: (n, 0, s)),
            ],
            out_specs=pl.BlockSpec((1, C_out, ts), lambda n, s: (n, 0, s)),
        ),
        compiler_params=pltpu.CompilerParams(
            dimension_semantics=("parallel", "parallel"),
            vmem_limit_bytes=vmem_limit),
    )(w_mat, b_col, f1, f2)
    return out.reshape(N, C_out, H, W)


# ---------------------------------------------------------------------------
# Reference + demo
# ---------------------------------------------------------------------------

def _reference(feat1, feat2, weight, bias, fusion_type):
    if fusion_type == "add":
        fused = feat1 + feat2
    elif fusion_type == "multiply":
        fused = feat1 * feat2
    else:
        fused = jnp.concatenate([feat1, feat2], axis=1)
    w = weight[:, :, 0, 0]  # (C_out, C_in)
    return jnp.einsum("nchw,oc->nohw", fused, w) + bias[None, :, None, None]


if __name__ == "__main__":
    # Small shapes consistent with the module: batch=2, channels=4, spatial=16.
    N, C, H, W = 2, 4, 16, 16

    key = jax.random.PRNGKey(0)
    k1, k2, kw, kb = jax.random.split(key, 4)

    feat1 = jax.random.normal(k1, (N, C, H, W), dtype=jnp.float32)
    feat2 = jax.random.normal(k2, (N, C, H, W), dtype=jnp.float32)

    for fusion_type in ("add", "multiply", "concat"):
        fused_channels = 2 * C if fusion_type == "concat" else C
        weight = 0.1 * jax.random.normal(
            kw, (C, fused_channels, 1, 1), dtype=jnp.float32)
        bias = 0.1 * jax.random.normal(kb, (C,), dtype=jnp.float32)

        out = lightweight_fuser(feat1, feat2, weight, bias,
                                fusion_type=fusion_type)
        out = jax.block_until_ready(out)

        ref = _reference(feat1, feat2, weight, bias, fusion_type)
        assert out.shape == (N, C, H, W)
        assert jnp.allclose(out, ref, atol=1e-5, rtol=1e-5), \
            f"mismatch vs reference for fusion_type={fusion_type}"

    print("KERNEL_OK")
</pallas_src>

<mosaic_0001>
module attributes {stable_mosaic.version = 11 : i64} {
  func.func @_fuser_kernel_vpu(%arg0: i32, %arg1: i32, %arg2: memref<4x4xf32, #tpu.memory_space<smem>>, %arg3: memref<4xf32, #tpu.memory_space<smem>>, %arg4: memref<1x4x2x128xf32, #tpu.memory_space<vmem>>, %arg5: memref<1x4x2x128xf32, #tpu.memory_space<vmem>>, %arg6: memref<1x4x2x128xf32, #tpu.memory_space<vmem>>) attributes {dimension_semantics = [#tpu.dimension_semantics<parallel>, #tpu.dimension_semantics<parallel>], iteration_bounds = array<i64: 2, 1>, scalar_prefetch = 0 : i64, scratch_operands = 0 : i64, tpu.core_type = #tpu.core_type<tc>, window_params = [{transform_indices = @transform_0, window_bounds = array<i64: 4, 4>}, {transform_indices = @transform_1, window_bounds = array<i64: 4>}, {transform_indices = @transform_2, window_bounds = array<i64: 1, 4, 2, 128>}, {transform_indices = @transform_3, window_bounds = array<i64: 1, 4, 2, 128>}, {transform_indices = @transform_4, window_bounds = array<i64: 1, 4, 2, 128>}]} {
    %c0 = arith.constant 0 : index
    %c0_0 = arith.constant 0 : index
    %c0_1 = arith.constant 0 : index
    %c0_2 = arith.constant 0 : index
    %0 = vector.load %arg4[%c0, %c0_0, %c0_1, %c0_2] : memref<1x4x2x128xf32, #tpu.memory_space<vmem>>, vector<1x4x2x128xf32>
    %c0_3 = arith.constant 0 : index
    %c0_4 = arith.constant 0 : index
    %c0_5 = arith.constant 0 : index
    %c0_6 = arith.constant 0 : index
    %1 = vector.load %arg5[%c0_3, %c0_4, %c0_5, %c0_6] : memref<1x4x2x128xf32, #tpu.memory_space<vmem>>, vector<1x4x2x128xf32>
    %2 = arith.addf %0, %1 : vector<1x4x2x128xf32>
    %cst = arith.constant 0.000000e+00 : f32
    %3 = vector.broadcast %cst : f32 to vector<1x2x128xf32>
    %c0_7 = arith.constant 0 : index
    %c0_8 = arith.constant 0 : index
    %4 = memref.load %arg2[%c0_7, %c0_8] : memref<4x4xf32, #tpu.memory_space<smem>>
    %5 = vector.extract_strided_slice %2 {offsets = [0, 0, 0, 0], sizes = [1, 1, 2, 128], strides = [1, 1, 1, 1]} : vector<1x4x2x128xf32> to vector<1x1x2x128xf32>
    %6 = vector.shape_cast %5 : vector<1x1x2x128xf32> to vector<1x2x128xf32>
    %7 = vector.broadcast %4 : f32 to vector<1x2x128xf32>
    %8 = arith.mulf %7, %6 : vector<1x2x128xf32>
    %9 = arith.addf %3, %8 : vector<1x2x128xf32>
    %c0_9 = arith.constant 0 : index
    %c1 = arith.constant 1 : index
    %10 = memref.load %arg2[%c0_9, %c1] : memref<4x4xf32, #tpu.memory_space<smem>>
    %11 = vector.extract_strided_slice %2 {offsets = [0, 1, 0, 0], sizes = [1, 1, 2, 128], strides = [1, 1, 1, 1]} : vector<1x4x2x128xf32> to vector<1x1x2x128xf32>
    %12 = vector.shape_cast %11 : vector<1x1x2x128xf32> to vector<1x2x128xf32>
    %13 = vector.broadcast %10 : f32 to vector<1x2x128xf32>
    %14 = arith.mulf %13, %12 : vector<1x2x128xf32>
    %15 = arith.addf %9, %14 : vector<1x2x128xf32>
    %c0_10 = arith.constant 0 : index
    %c2 = arith.constant 2 : index
    %16 = memref.load %arg2[%c0_10, %c2] : memref<4x4xf32, #tpu.memory_space<smem>>
    %17 = vector.extract_strided_slice %2 {offsets = [0, 2, 0, 0], sizes = [1, 1, 2, 128], strides = [1, 1, 1, 1]} : vector<1x4x2x128xf32> to vector<1x1x2x128xf32>
    %18 = vector.shape_cast %17 : vector<1x1x2x128xf32> to vector<1x2x128xf32>
    %19 = vector.broadcast %16 : f32 to vector<1x2x128xf32>
    %20 = arith.mulf %19, %18 : vector<1x2x128xf32>
    %21 = arith.addf %15, %20 : vector<1x2x128xf32>
    %c0_11 = arith.constant 0 : index
    %c3 = arith.constant 3 : index
    %22 = memref.load %arg2[%c0_11, %c3] : memref<4x4xf32, #tpu.memory_space<smem>>
    %23 = vector.extract_strided_slice %2 {offsets = [0, 3, 0, 0], sizes = [1, 1, 2, 128], strides = [1, 1, 1, 1]} : vector<1x4x2x128xf32> to vector<1x1x2x128xf32>
    %24 = vector.shape_cast %23 : vector<1x1x2x128xf32> to vector<1x2x128xf32>
    %25 = vector.broadcast %22 : f32 to vector<1x2x128xf32>
    %26 = arith.mulf %25, %24 : vector<1x2x128xf32>
    %27 = arith.addf %21, %26 : vector<1x2x128xf32>
    %c0_12 = arith.constant 0 : index
    %28 = memref.load %arg3[%c0_12] : memref<4xf32, #tpu.memory_space<smem>>
    %29 = vector.broadcast %28 : f32 to vector<1x2x128xf32>
    %30 = arith.addf %27, %29 : vector<1x2x128xf32>
    %31 = vector.shape_cast %30 : vector<1x2x128xf32> to vector<1x1x2x128xf32>
    %c0_13 = arith.constant 0 : index
    %c0_14 = arith.constant 0 : index
    %c0_15 = arith.constant 0 : index
    %c0_16 = arith.constant 0 : index
    %32 = vector.load %arg6[%c0_13, %c0_14, %c0_15, %c0_16] : memref<1x4x2x128xf32, #tpu.memory_space<vmem>>, vector<1x1x2x128xf32>
    tpu.vector_store %arg6[%c0_13, %c0_14, %c0_15, %c0_16], %31 {strides = array<i32>} : memref<1x4x2x128xf32, #tpu.memory_space<vmem>>, vector<1x1x2x128xf32>,
    %cst_17 = arith.constant 0.000000e+00 : f32
    %33 = vector.broadcast %cst_17 : f32 to vector<1x2x128xf32>
    %c1_18 = arith.constant 1 : index
    %c0_19 = arith.constant 0 : index
    %34 = memref.load %arg2[%c1_18, %c0_19] : memref<4x4xf32, #tpu.memory_space<smem>>
    %35 = vector.extract_strided_slice %2 {offsets = [0, 0, 0, 0], sizes = [1, 1, 2, 128], strides = [1, 1, 1, 1]} : vector<1x4x2x128xf32> to vector<1x1x2x128xf32>
    %36 = vector.shape_cast %35 : vector<1x1x2x128xf32> to vector<1x2x128xf32>
    %37 = vector.broadcast %34 : f32 to vector<1x2x128xf32>
    %38 = arith.mulf %37, %36 : vector<1x2x128xf32>
    %39 = arith.addf %33, %38 : vector<1x2x128xf32>
    %c1_20 = arith.constant 1 : index
    %c1_21 = arith.constant 1 : index
    %40 = memref.load %arg2[%c1_20, %c1_21] : memref<4x4xf32, #tpu.memory_space<smem>>
    %41 = vector.extract_strided_slice %2 {offsets = [0, 1, 0, 0], sizes = [1, 1, 2, 128], strides = [1, 1, 1, 1]} : vector<1x4x2x128xf32> to vector<1x1x2x128xf32>
    %42 = vector.shape_cast %41 : vector<1x1x2x128xf32> to vector<1x2x128xf32>
    %43 = vector.broadcast %40 : f32 to vector<1x2x128xf32>
    %44 = arith.mulf %43, %42 : vector<1x2x128xf32>
    %45 = arith.addf %39, %44 : vector<1x2x128xf32>
    %c1_22 = arith.constant 1 : index
    %c2_23 = arith.constant 2 : index
    %46 = memref.load %arg2[%c1_22, %c2_23] : memref<4x4xf32, #tpu.memory_space<smem>>
    %47 = vector.extract_strided_slice %2 {offsets = [0, 2, 0, 0], sizes = [1, 1, 2, 128], strides = [1, 1, 1, 1]} : vector<1x4x2x128xf32> to vector<1x1x2x128xf32>
    %48 = vector.shape_cast %47 : vector<1x1x2x128xf32> to vector<1x2x128xf32>
    %49 = vector.broadcast %46 : f32 to vector<1x2x128xf32>
    %50 = arith.mulf %49, %48 : vector<1x2x128xf32>
    %51 = arith.addf %45, %50 : vector<1x2x128xf32>
    %c1_24 = arith.constant 1 : index
    %c3_25 = arith.constant 3 : index
    %52 = memref.load %arg2[%c1_24, %c3_25] : memref<4x4xf32, #tpu.memory_space<smem>>
    %53 = vector.extract_strided_slice %2 {offsets = [0, 3, 0, 0], sizes = [1, 1, 2, 128], strides = [1, 1, 1, 1]} : vector<1x4x2x128xf32> to vector<1x1x2x128xf32>
    %54 = vector.shape_cast %53 : vector<1x1x2x128xf32> to vector<1x2x128xf32>
    %55 = vector.broadcast %52 : f32 to vector<1x2x128xf32>
    %56 = arith.mulf %55, %54 : vector<1x2x128xf32>
    %57 = arith.addf %51, %56 : vector<1x2x128xf32>
    %c1_26 = arith.constant 1 : index
    %58 = memref.load %arg3[%c1_26] : memref<4xf32, #tpu.memory_space<smem>>
    %59 = vector.broadcast %58 : f32 to vector<1x2x128xf32>
    %60 = arith.addf %57, %59 : vector<1x2x128xf32>
    %61 = vector.shape_cast %60 : vector<1x2x128xf32> to vector<1x1x2x128xf32>
    %c0_27 = arith.constant 0 : index
    %c1_28 = arith.constant 1 : index
    %c0_29 = arith.constant 0 : index
    %c0_30 = arith.constant 0 : index
    %62 = vector.load %arg6[%c0_27, %c1_28, %c0_29, %c0_30] : memref<1x4x2x128xf32, #tpu.memory_space<vmem>>, vector<1x1x2x128xf32>
    tpu.vector_store %arg6[%c0_27, %c1_28, %c0_29, %c0_30], %61 {strides = array<i32>} : memref<1x4x2x128xf32, #tpu.memory_space<vmem>>, vector<1x1x2x128xf32>,
    %cst_31 = arith.constant 0.000000e+00 : f32
    %63 = vector.broadcast %cst_31 : f32 to vector<1x2x128xf32>
    %c2_32 = arith.constant 2 : index
    %c0_33 = arith.constant 0 : index
    %64 = memref.load %arg2[%c2_32, %c0_33] : memref<4x4xf32, #tpu.memory_space<smem>>
    %65 = vector.extract_strided_slice %2 {offsets = [0, 0, 0, 0], sizes = [1, 1, 2, 128], strides = [1, 1, 1, 1]} : vector<1x4x2x128xf32> to vector<1x1x2x128xf32>
    %66 = vector.shape_cast %65 : vector<1x1x2x128xf32> to vector<1x2x128xf32>
    %67 = vector.broadcast %64 : f32 to vector<1x2x128xf32>
    %68 = arith.mulf %67, %66 : vector<1x2x128xf32>
    %69 = arith.addf %63, %68 : vector<1x2x128xf32>
    %c2_34 = arith.constant 2 : index
    %c1_35 = arith.constant 1 : index
    %70 = memref.load %arg2[%c2_34, %c1_35] : memref<4x4xf32, #tpu.memory_space<smem>>
    %71 = vector.extract_strided_slice %2 {offsets = [0, 1, 0, 0], sizes = [1, 1, 2, 128], strides = [1, 1, 1, 1]} : vector<1x4x2x128xf32> to vector<1x1x2x128xf32>
    %72 = vector.shape_cast %71 : vector<1x1x2x128xf32> to vector<1x2x128xf32>
    %73 = vector.broadcast %70 : f32 to vector<1x2x128xf32>
    %74 = arith.mulf %73, %72 : vector<1x2x128xf32>
    %75 = arith.addf %69, %74 : vector<1x2x128xf32>
    %c2_36 = arith.constant 2 : index
    %c2_37 = arith.constant 2 : index
    %76 = memref.load %arg2[%c2_36, %c2_37] : memref<4x4xf32, #tpu.memory_space<smem>>
    %77 = vector.extract_strided_slice %2 {offsets = [0, 2, 0, 0], sizes = [1, 1, 2, 128], strides = [1, 1, 1, 1]} : vector<1x4x2x128xf32> to vector<1x1x2x128xf32>
    %78 = vector.shape_cast %77 : vector<1x1x2x128xf32> to vector<1x2x128xf32>
    %79 = vector.broadcast %76 : f32 to vector<1x2x128xf32>
    %80 = arith.mulf %79, %78 : vector<1x2x128xf32>
    %81 = arith.addf %75, %80 : vector<1x2x128xf32>
    %c2_38 = arith.constant 2 : index
    %c3_39 = arith.constant 3 : index
    %82 = memref.load %arg2[%c2_38, %c3_39] : memref<4x4xf32, #tpu.memory_space<smem>>
    %83 = vector.extract_strided_slice %2 {offsets = [0, 3, 0, 0], sizes = [1, 1, 2, 128], strides = [1, 1, 1, 1]} : vector<1x4x2x128xf32> to vector<1x1x2x128xf32>
    %84 = vector.shape_cast %83 : vector<1x1x2x128xf32> to vector<1x2x128xf32>
    %85 = vector.broadcast %82 : f32 to vector<1x2x128xf32>
    %86 = arith.mulf %85, %84 : vector<1x2x128xf32>
    %87 = arith.addf %81, %86 : vector<1x2x128xf32>
    %c2_40 = arith.constant 2 : index
    %88 = memref.load %arg3[%c2_40] : memref<4xf32, #tpu.memory_space<smem>>
    %89 = vector.broadcast %88 : f32 to vector<1x2x128xf32>
    %90 = arith.addf %87, %89 : vector<1x2x128xf32>
    %91 = vector.shape_cast %90 : vector<1x2x128xf32> to vector<1x1x2x128xf32>
    %c0_41 = arith.constant 0 : index
    %c2_42 = arith.constant 2 : index
    %c0_43 = arith.constant 0 : index
    %c0_44 = arith.constant 0 : index
    %92 = vector.load %arg6[%c0_41, %c2_42, %c0_43, %c0_44] : memref<1x4x2x128xf32, #tpu.memory_space<vmem>>, vector<1x1x2x128xf32>
    tpu.vector_store %arg6[%c0_41, %c2_42, %c0_43, %c0_44], %91 {strides = array<i32>} : memref<1x4x2x128xf32, #tpu.memory_space<vmem>>, vector<1x1x2x128xf32>,
    %cst_45 = arith.constant 0.000000e+00 : f32
    %93 = vector.broadcast %cst_45 : f32 to vector<1x2x128xf32>
    %c3_46 = arith.constant 3 : index
    %c0_47 = arith.constant 0 : index
    %94 = memref.load %arg2[%c3_46, %c0_47] : memref<4x4xf32, #tpu.memory_space<smem>>
    %95 = vector.extract_strided_slice %2 {offsets = [0, 0, 0, 0], sizes = [1, 1, 2, 128], strides = [1, 1, 1, 1]} : vector<1x4x2x128xf32> to vector<1x1x2x128xf32>
    %96 = vector.shape_cast %95 : vector<1x1x2x128xf32> to vector<1x2x128xf32>
    %97 = vector.broadcast %94 : f32 to vector<1x2x128xf32>
    %98 = arith.mulf %97, %96 : vector<1x2x128xf32>
    %99 = arith.addf %93, %98 : vector<1x2x128xf32>
    %c3_48 = arith.constant 3 : index
    %c1_49 = arith.constant 1 : index
    %100 = memref.load %arg2[%c3_48, %c1_49] : memref<4x4xf32, #tpu.memory_space<smem>>
    %101 = vector.extract_strided_slice %2 {offsets = [0, 1, 0, 0], sizes = [1, 1, 2, 128], strides = [1, 1, 1, 1]} : vector<1x4x2x128xf32> to vector<1x1x2x128xf32>
    %102 = vector.shape_cast %101 : vector<1x1x2x128xf32> to vector<1x2x128xf32>
    %103 = vector.broadcast %100 : f32 to vector<1x2x128xf32>
    %104 = arith.mulf %103, %102 : vector<1x2x128xf32>
    %105 = arith.addf %99, %104 : vector<1x2x128xf32>
    %c3_50 = arith.constant 3 : index
    %c2_51 = arith.constant 2 : index
    %106 = memref.load %arg2[%c3_50, %c2_51] : memref<4x4xf32, #tpu.memory_space<smem>>
    %107 = vector.extract_strided_slice %2 {offsets = [0, 2, 0, 0], sizes = [1, 1, 2, 128], strides = [1, 1, 1, 1]} : vector<1x4x2x128xf32> to vector<1x1x2x128xf32>
    %108 = vector.shape_cast %107 : vector<1x1x2x128xf32> to vector<1x2x128xf32>
    %109 = vector.broadcast %106 : f32 to vector<1x2x128xf32>
    %110 = arith.mulf %109, %108 : vector<1x2x128xf32>
    %111 = arith.addf %105, %110 : vector<1x2x128xf32>
    %c3_52 = arith.constant 3 : index
    %c3_53 = arith.constant 3 : index
    %112 = memref.load %arg2[%c3_52, %c3_53] : memref<4x4xf32, #tpu.memory_space<smem>>
    %113 = vector.extract_strided_slice %2 {offsets = [0, 3, 0, 0], sizes = [1, 1, 2, 128], strides = [1, 1, 1, 1]} : vector<1x4x2x128xf32> to vector<1x1x2x128xf32>
    %114 = vector.shape_cast %113 : vector<1x1x2x128xf32> to vector<1x2x128xf32>
    %115 = vector.broadcast %112 : f32 to vector<1x2x128xf32>
    %116 = arith.mulf %115, %114 : vector<1x2x128xf32>
    %117 = arith.addf %111, %116 : vector<1x2x128xf32>
    %c3_54 = arith.constant 3 : index
    %118 = memref.load %arg3[%c3_54] : memref<4xf32, #tpu.memory_space<smem>>
    %119 = vector.broadcast %118 : f32 to vector<1x2x128xf32>
    %120 = arith.addf %117, %119 : vector<1x2x128xf32>
    %121 = vector.shape_cast %120 : vector<1x2x128xf32> to vector<1x1x2x128xf32>
    %c0_55 = arith.constant 0 : index
    %c3_56 = arith.constant 3 : index
    %c0_57 = arith.constant 0 : index
    %c0_58 = arith.constant 0 : index
    %122 = vector.load %arg6[%c0_55, %c3_56, %c0_57, %c0_58] : memref<1x4x2x128xf32, #tpu.memory_space<vmem>>, vector<1x1x2x128xf32>
    tpu.vector_store %arg6[%c0_55, %c3_56, %c0_57, %c0_58], %121 {strides = array<i32>} : memref<1x4x2x128xf32, #tpu.memory_space<vmem>>, vector<1x1x2x128xf32>,
    return
  }
  func.func @transform_0(%arg0: i32, %arg1: i32) -> (i32, i32) {
    %c0_i32 = arith.constant 0 : i32
    %c0_i32_0 = arith.constant 0 : i32
    %c0_i32_1 = arith.constant 0 : i32
    return %c0_i32, %c0_i32_0 : i32, i32
  }
  func.func @transform_1(%arg0: i32, %arg1: i32) -> i32 {
    %c0_i32 = arith.constant 0 : i32
    %c0_i32_0 = arith.constant 0 : i32
    return %c0_i32 : i32
  }
  func.func @transform_2(%arg0: i32, %arg1: i32) -> (i32, i32, i32, i32) {
    %c0_i32 = arith.constant 0 : i32
    %c0_i32_0 = arith.constant 0 : i32
    %c0_i32_1 = arith.constant 0 : i32
    return %arg0, %c0_i32, %arg1, %c0_i32_0 : i32, i32, i32, i32
  }
  func.func @transform_3(%arg0: i32, %arg1: i32) -> (i32, i32, i32, i32) {
    %c0_i32 = arith.constant 0 : i32
    %c0_i32_0 = arith.constant 0 : i32
    %c0_i32_1 = arith.constant 0 : i32
    return %arg0, %c0_i32, %arg1, %c0_i32_0 : i32, i32, i32, i32
  }
  func.func @transform_4(%arg0: i32, %arg1: i32) -> (i32, i32, i32, i32) {
    %c0_i32 = arith.constant 0 : i32
    %c0_i32_0 = arith.constant 0 : i32
    %c0_i32_1 = arith.constant 0 : i32
    return %arg0, %c0_i32, %arg1, %c0_i32_0 : i32, i32, i32, i32
  }
}

</mosaic_0001>

<llo_original>
// kernel: tpu_custom_call.1
$region0: #{tpu_custom_call.1}
  #allocation0 [shape = 'u32[]', space=smem, size = 0x4, offset = 0x4, fixed_abs, tag = 'smem constant byte address 0x4 - core index']
  #allocation1 [shape = 'u32[144,128]{1,0:T(1,128)}', space=vmem, size = 0x12000, scoped, tag = 'internal scratch']
  %s0 = inlined_call_operand.hbm [shape: f32[4,4], index: 0, kind: input, shape index: {}]
  %s1 = inlined_call_operand.vmem [shape: f32[4], index: 1, kind: input, shape index: {}]
  %s2 = inlined_call_operand.hbm [shape: f32[2,4,2,128], index: 2, kind: input, shape index: {}]
  %s3 = inlined_call_operand.hbm [shape: f32[2,4,2,128], index: 3, kind: input, shape index: {}]
  %s4 = inlined_call_operand.hbm [shape: f32[2,4,2,128], index: 4, kind: output, shape index: {}]
  %s5 = sld [smem:[#allocation0]]
  $region65: #{tpu_custom_call.1} parent=0
    _
  %s7 = ssub.s32 1, %s5
  %s8 = scalar_select 0, %s7, %s5
  $region1: #{tpu_custom_call.1} parent=0
    #allocation2 [shape = 'u8[2048]{0}', space=smem, size = 0x800, scoped, tag = 'input window, operand 0, single buffered']
    #allocation3 [shape = 's32[2]{0}', space=sflag, size = 0x8, scoped, tag = 'scoped memory for tpu_custom_call.1']
    #allocation4 [shape = 's32[2]{0}', space=sflag, size = 0x8, scoped, tag = 'scoped memory for tpu_custom_call.1']
    #allocation5 [shape = 's32[2]{0}', space=sflag, size = 0x8, scoped, tag = 'scoped memory for tpu_custom_call.1']
    #allocation6 [shape = 's32[2]{0}', space=sflag, size = 0x8, scoped, tag = 'scoped memory for tpu_custom_call.1']
    #allocation7 [shape = 'u8[512]{0}', space=smem, size = 0x200, scoped, tag = 'input window, operand 1, single buffered']
    #allocation8 [shape = 'u8[8192]{0}', space=vmem, size = 0x2000, scoped, tag = 'input window, operand 2']
    #allocation9 [shape = 'u8[8192]{0}', space=vmem, size = 0x2000, scoped, tag = 'input window, operand 3']
    #allocation10 [shape = 's32[2]{0}', space=sflag, size = 0x8, scoped, tag = 'scoped memory for tpu_custom_call.1']
    #allocation11 [shape = 'u8[8192]{0}', space=vmem, size = 0x2000, scoped, tag = 'output window, operand 0']
    %9 = vsyncpa [#allocation5], 0
    %10 = vsyncpa [#allocation6], 0
    %11 = vsyncpa [#allocation3], 0
    %s12 = scalar_lea.sflag [#allocation3], 1
    %13 = vsyncpa %s12, 0
    %14 = vsyncpa [#allocation10], 0
    %s15 = scalar_lea.sflag [#allocation10], 1
    %16 = vsyncpa %s15, 0
    %17 = vsyncpa [#allocation4], 0
    %s18 = scalar_lea.sflag [#allocation4], 1
    %19 = vsyncpa %s18, 0
    loop: start=0, step=1, limit=4
    $region2: #{tpu_custom_call.1} parent=1 // loop_pre_header
      _
    $region3: #{tpu_custom_call.1} parent=1 // loop_header
      %s21 = sphi 0, %s25
      %p22 = scmp.ge.s32.totalorder %s21, 4
      %s28 = sphi 0, %s40
      %s29 = sphi 0, %s36
      %s30 = sphi 0, %s28
      %s31 = sphi 0, %s29
      %s32 = sphi 0, %s30
      %s33 = sphi 0, %s31
      %s41 = sphi 0, %s41
      %s43 = sphi 0, %s41
      %s44 = sphi 0, %s43
      %s58 = sphi 0, %s44
      %s62 = sphi 0, %s62
      %s64 = sphi 0, %s62
      %s65 = sphi 0, %s64
      %s79 = sphi 0, %s65
      %s87 = sphi 0, %s89
      %s90 = sphi 0, %s87
      %s91 = sphi 0, %s90
      %s107 = sphi 0, %s91
      %s115 = sphi 0, %s117
      %s118 = sphi 0, %s115
      %s119 = sphi 0, %s118
      %s135 = sphi 0, %s119
      %s143 = sphi 0, %s145
      %s146 = sphi 0, %s143
      %s147 = sphi 0, %s146
      %s163 = sphi 0, %s147
    $region4: #{tpu_custom_call.1} parent=1 // loop_header_branch
      %24 = sbr.rel (%p22) target = $region8
    $region5: #{tpu_custom_call.1} parent=1 // loop_body
      %s26 = ssub.s32 %s21, 1
      %s27 = ssub.s32 %s21, 2
      %s34 = sadd.s32 1, %s29
      %p35 = scmp.ge.s32.totalorder %s34, 1
      %s36 = scalar_select %p35, 0, %s34
      %s37 = sadd.s32 1, %s28
      %s38 = scalar_select %p35, %s37, %s28
      %p39 = scmp.ge.s32.totalorder %s38, 2
      %s40 = scalar_select %p39, 0, %s38
      %s42 = sadd.s32 %s41, 1
      %p45 = scmp.eq.s32.totalorder %s21, 1
      %p46 = scmp.ne.s32.totalorder %s41, %s43
      %p47 = scmp.eq.s32.totalorder %s21, 0
      %p48 = por %p46, %p47
      %p49 = scmp.ne.s32.totalorder %s41, %s43
      %p50 = scmp.eq.s32.totalorder %s26, 1
      %p51 = por %p49, %p50
      %p52 = scmp.ne.s32.totalorder %s43, %s44
      %p53 = scmp.eq.s32.totalorder %s26, 0
      %p54 = por %p52, %p53
      %p55 = scmp.ne.s32.totalorder %s43, %s44
      %p56 = scmp.eq.s32.totalorder %s27, 1
      %p57 = por %p55, %p56
      %p59 = scmp.ne.s32.totalorder %s44, %s58
      %p60 = scmp.eq.s32.totalorder %s27, 0
      %p61 = por %p59, %p60
      %s63 = sadd.s32 %s62, 1
      %p66 = scmp.eq.s32.totalorder %s21, 1
      %p67 = scmp.ne.s32.totalorder %s62, %s64
      %p68 = scmp.eq.s32.totalorder %s21, 0
      %p69 = por %p67, %p68
      %p70 = scmp.ne.s32.totalorder %s62, %s64
      %p71 = scmp.eq.s32.totalorder %s26, 1
      %p72 = por %p70, %p71
      %p73 = scmp.ne.s32.totalorder %s64, %s65
      %p74 = scmp.eq.s32.totalorder %s26, 0
      %p75 = por %p73, %p74
      %p76 = scmp.ne.s32.totalorder %s64, %s65
      %p77 = scmp.eq.s32.totalorder %s27, 1
      %p78 = por %p76, %p77
      %p80 = scmp.ne.s32.totalorder %s65, %s79
      %p81 = scmp.eq.s32.totalorder %s27, 0
      %p82 = por %p80, %p81
      %s83 = ssub.s32 %s28, %s40
      %s84 = ssub.s32 %s29, %s36
      %s85 = sor.u32 %s83, %s84
      %p86 = scmp.eq.s32.totalorder %s85, 0
      %s88 = sadd.s32 %s87, 1
      %s89 = scalar_select %p86, %s87, %s88
      %p92 = pneg %p86
      %p93 = scmp.eq.s32.totalorder %s21, 1
      %p94 = por %p92, %p93
      %p95 = scmp.ne.s32.totalorder %s87, %s90
      %p96 = scmp.eq.s32.totalorder %s21, 0
      %p97 = por %p95, %p96
      %p98 = scmp.ne.s32.totalorder %s87, %s90
      %p99 = scmp.eq.s32.totalorder %s26, 1
      %p100 = por %p98, %p99
      %p101 = scmp.ne.s32.totalorder %s90, %s91
      %p102 = scmp.eq.s32.totalorder %s26, 0
      %p103 = por %p101, %p102
      %p104 = scmp.ne.s32.totalorder %s90, %s91
      %p105 = scmp.eq.s32.totalorder %s27, 1
      %p106 = por %p104, %p105
      %p108 = scmp.ne.s32.totalorder %s91, %s107
      %p109 = scmp.eq.s32.totalorder %s27, 0
      %p110 = por %p108, %p109
      %s111 = ssub.s32 %s28, %s40
      %s112 = ssub.s32 %s29, %s36
      %s113 = sor.u32 %s111, %s112
      %p114 = scmp.eq.s32.totalorder %s113, 0
      %s116 = sadd.s32 %s115, 1
      %s117 = scalar_select %p114, %s115, %s116
      %p120 = pneg %p114
      %p121 = scmp.eq.s32.totalorder %s21, 1
      %p122 = por %p120, %p121
      %p123 = scmp.ne.s32.totalorder %s115, %s118
      %p124 = scmp.eq.s32.totalorder %s21, 0
      %p125 = por %p123, %p124
      %p126 = scmp.ne.s32.totalorder %s115, %s118
      %p127 = scmp.eq.s32.totalorder %s26, 1
      %p128 = por %p126, %p127
      %p129 = scmp.ne.s32.totalorder %s118, %s119
      %p130 = scmp.eq.s32.totalorder %s26, 0
      %p131 = por %p129, %p130
      %p132 = scmp.ne.s32.totalorder %s118, %s119
      %p133 = scmp.eq.s32.totalorder %s27, 1
      %p134 = por %p132, %p133
      %p136 = scmp.ne.s32.totalorder %s119, %s135
      %p137 = scmp.eq.s32.totalorder %s27, 0
      %p138 = por %p136, %p137
      %s139 = ssub.s32 %s28, %s40
      %s140 = ssub.s32 %s29, %s36
      %s141 = sor.u32 %s139, %s140
      %p142 = scmp.eq.s32.totalorder %s141, 0
      %s144 = sadd.s32 %s143, 1
      %s145 = scalar_select %p142, %s143, %s144
      %p148 = pneg %p142
      %p149 = scmp.eq.s32.totalorder %s21, 1
      %p150 = por %p148, %p149
      %p151 = scmp.ne.s32.totalorder %s143, %s146
      %p152 = scmp.eq.s32.totalorder %s21, 0
      %p153 = por %p151, %p152
      %p154 = scmp.ne.s32.totalorder %s143, %s146
      %p155 = scmp.eq.s32.totalorder %s26, 1
      %p156 = por %p154, %p155
      %p157 = scmp.ne.s32.totalorder %s146, %s147
      %p158 = scmp.eq.s32.totalorder %s26, 0
      %p159 = por %p157, %p158
      %p160 = scmp.ne.s32.totalorder %s146, %s147
      %p161 = scmp.eq.s32.totalorder %s27, 1
      %p162 = por %p160, %p161
      %p164 = scmp.ne.s32.totalorder %s147, %s163
      %p165 = scmp.eq.s32.totalorder %s27, 0
      %p166 = por %p164, %p165
      %p167 = scmp.le.s32.totalorder 1, %s21
      %p168 = scmp.lt.s32.totalorder %s21, 3
      %p169 = pnand %p167, %p168
      %p170 = pneg %p169
      // Predicated region
      $region9: #{tpu_custom_call.1} parent=5 // pred_check
        _
      $region10: #{tpu_custom_call.1} parent=5 // pred_check_branch
        %172 = sbr.rel (%p169) target = $region12
      $region11: #{tpu_custom_call.1} parent=5 // pred_region
        %s173 = ssub.s32 %s21, 1
        // Predicated region
        $region13: #{tpu_custom_call.1} parent=11 // pred_check
          %p174 = pneg %p54
        $region14: #{tpu_custom_call.1} parent=11 // pred_check_branch
          %176 = sbr.rel (%p174) target = $region16
        $region15: #{tpu_custom_call.1} parent=11 // pred_region
          %s178 = ssub.s32 64, 64
          %179 = vsyncadd [#allocation5], %s178
          %182 = dma.hbm_to_smem %s0, 64, [#allocation2], [#allocation5]
        $region16: #{tpu_custom_call.1} parent=11 // pred_fallthru
          _
        // Predicated region
        $region17: #{tpu_custom_call.1} parent=11 // pred_check
          %p183 = pneg %p75
        $region18: #{tpu_custom_call.1} parent=11 // pred_check_branch
          %185 = sbr.rel (%p183) target = $region20
        $region19: #{tpu_custom_call.1} parent=11 // pred_region
          %s187 = ssub.s32 16, 16
          %188 = vsyncadd [#allocation6], %s187
          %s190 = sshll.u32 %s1, 4
          %s191 = int_to_ptr.vmem [resolvable:$true] %s190
          %193 = dma.vmem_to_smem %s191, 16, [#allocation7], [#allocation6]
        $region20: #{tpu_custom_call.1} parent=11 // pred_fallthru
          _
      $region12: #{tpu_custom_call.1} parent=5 // pred_fallthru
        _
      %p194 = scmp.lt.s32.totalorder %s21, 2
      // Predicated region
      $region21: #{tpu_custom_call.1} parent=5 // pred_check
        %p195 = pneg %p194
      $region22: #{tpu_custom_call.1} parent=5 // pred_check_branch
        %197 = sbr.rel (%p195) target = $region24
      $region23: #{tpu_custom_call.1} parent=5 // pred_region
        // Predicated region
        $region25: #{tpu_custom_call.1} parent=23 // pred_check
          %p198 = pneg %p97
        $region26: #{tpu_custom_call.1} parent=23 // pred_check_branch
          %200 = sbr.rel (%p198) target = $region28
        $region27: #{tpu_custom_call.1} parent=23 // pred_region
          %s201 = sand.u32 %s87, 1
          %s202 = scalar_lea.sflag [#allocation3], %s201
          %s203 = sand.u32 %s87, 1
          %s204 = smul.addr %s203, 8
          %s205 = scalar_lea.vmem [#allocation8], %s204
          %s207 = ssub.s32 128, 128
          %208 = vsyncadd %s202, %s207
          %s209 = smul.addr %s28, 4
          %s210 = sadd.s32 %s29, %s209
          %s211 = smul.addr %s210, 32
          %s212 = scalar_lea.hbm %s2, %s211
          %s213 = sshll.u32 %s205, 4
          %s214 = int_to_ptr.vmem [resolvable:$true] %s213
          %219 = dma.hbm_to_vmem [thread:$0]  %s212, 128, %s214, %s202, 32, 32, 2
        $region28: #{tpu_custom_call.1} parent=23 // pred_fallthru
          _
        // Predicated region
        $region29: #{tpu_custom_call.1} parent=23 // pred_check
          %p220 = pneg %p125
        $region30: #{tpu_custom_call.1} parent=23 // pred_check_branch
          %222 = sbr.rel (%p220) target = $region32
        $region31: #{tpu_custom_call.1} parent=23 // pred_region
          %s223 = sand.u32 %s115, 1
          %s224 = scalar_lea.sflag [#allocation10], %s223
          %s225 = sand.u32 %s115, 1
          %s226 = smul.addr %s225, 8
          %s227 = scalar_lea.vmem [#allocation9], %s226
          %s229 = ssub.s32 128, 128
          %230 = vsyncadd %s224, %s229
          %s231 = smul.addr %s28, 4
          %s232 = sadd.s32 %s29, %s231
          %s233 = smul.addr %s232, 32
          %s234 = scalar_lea.hbm %s3, %s233
          %s235 = sshll.u32 %s227, 4
          %s236 = int_to_ptr.vmem [resolvable:$true] %s235
          %241 = dma.hbm_to_vmem [thread:$0]  %s234, 128, %s236, %s224, 32, 32, 2
        $region32: #{tpu_custom_call.1} parent=23 // pred_fallthru
          _
      $region24: #{tpu_custom_call.1} parent=5 // pred_fallthru
        _
      %p242 = scmp.le.s32.totalorder 1, %s21
      %p243 = scmp.lt.s32.totalorder %s21, 3
      %p244 = pnand %p242, %p243
      %p245 = pneg %p244
      // Predicated region
      $region33: #{tpu_custom_call.1} parent=5 // pred_check
        _
      $region34: #{tpu_custom_call.1} parent=5 // pred_check_branch
        %247 = sbr.rel (%p244) target = $region36
      $region35: #{tpu_custom_call.1} parent=5 // pred_region
        %s248 = ssub.s32 %s21, 1
        // Predicated region
        $region37: #{tpu_custom_call.1} parent=35 // pred_check
          %p249 = pneg %p54
        $region38: #{tpu_custom_call.1} parent=35 // pred_check_branch
          %251 = sbr.rel (%p249) target = $region40
        $region39: #{tpu_custom_call.1} parent=35 // pred_region
          %252 = dma.done [#allocation5], 64
        $region40: #{tpu_custom_call.1} parent=35 // pred_fallthru
          _
        // Predicated region
        $region41: #{tpu_custom_call.1} parent=35 // pred_check
          %p253 = pneg %p75
        $region42: #{tpu_custom_call.1} parent=35 // pred_check_branch
          %255 = sbr.rel (%p253) target = $region44
        $region43: #{tpu_custom_call.1} parent=35 // pred_region
          %256 = dma.done [#allocation6], 16
        $region44: #{tpu_custom_call.1} parent=35 // pred_fallthru
          _
        %s257 = sand.u32 %s90, 1
        %s258 = scalar_lea.sflag [#allocation3], %s257
        %s259 = sand.u32 %s90, 1
        %s260 = smul.addr %s259, 8
        %s261 = scalar_lea.vmem [#allocation8], %s260
        // Predicated region
        $region45: #{tpu_custom_call.1} parent=35 // pred_check
          %p262 = pneg %p103
        $region46: #{tpu_custom_call.1} parent=35 // pred_check_branch
          %264 = sbr.rel (%p262) target = $region48
        $region47: #{tpu_custom_call.1} parent=35 // pred_region
          %265 = dma.done %s258, 128
        $region48: #{tpu_custom_call.1} parent=35 // pred_fallthru
          _
        %s266 = sand.u32 %s118, 1
        %s267 = scalar_lea.sflag [#allocation10], %s266
        %s268 = sand.u32 %s118, 1
        %s269 = smul.addr %s268, 8
        %s270 = scalar_lea.vmem [#allocation9], %s269
        // Predicated region
        $region49: #{tpu_custom_call.1} parent=35 // pred_check
          %p271 = pneg %p131
        $region50: #{tpu_custom_call.1} parent=35 // pred_check_branch
          %273 = sbr.rel (%p271) target = $region52
        $region51: #{tpu_custom_call.1} parent=35 // pred_region
          %274 = dma.done %s267, 128
        $region52: #{tpu_custom_call.1} parent=35 // pred_fallthru
          _
        %275 = sfence
        %p276 = pneg %p54
        %p277 = pneg %p51
        %p278 = pneg %p75
        %p279 = pneg %p72
        %s280 = sand.u32 %s90, 1
        %s281 = scalar_lea.sflag [#allocation3], %s280
        %s282 = sand.u32 %s90, 1
        %s283 = smul.addr %s282, 8
        %s284 = scalar_lea.vmem [#allocation8], %s283
        %p285 = pneg %p103
        %p286 = pneg %p100
        %s287 = sand.u32 %s118, 1
        %s288 = scalar_lea.sflag [#allocation10], %s287
        %s289 = sand.u32 %s118, 1
        %s290 = smul.addr %s289, 8
        %s291 = scalar_lea.vmem [#allocation9], %s290
        %p292 = pneg %p131
        %p293 = pneg %p128
        %p294 = pneg %p159
        %p295 = pneg %p156
        %s296 = sand.u32 %s146, 1
        %s297 = scalar_lea.sflag [#allocation4], %s296
        %s298 = sand.u32 %s146, 1
        %s299 = smul.addr %s298, 8
        %s300 = scalar_lea.vmem [#allocation11], %s299
        %v301 = vld [vmem:[%s261] sm:$0x3]
        %v302 = vld [vmem:[%s261 + $0x2] sm:$0x3]
        %v303 = vld [vmem:[%s261 + $0x4] sm:$0x3]
        %v304 = vld [vmem:[%s261 + $0x6] sm:$0x3]
        %v305 = vld [vmem:[%s270] sm:$0x3]
        %v306 = vld [vmem:[%s270 + $0x2] sm:$0x3]
        %v307 = vld [vmem:[%s270 + $0x4] sm:$0x3]
        %v308 = vld [vmem:[%s270 + $0x6] sm:$0x3]
        %v309 = vadd.f32 %v301, %v305
        %v310 = vadd.f32 %v302, %v306
        %v311 = vadd.f32 %v303, %v307
        %v312 = vadd.f32 %v304, %v308
        %s313 = sld [smem:[#allocation2]]
        %v314 = vstv %s313
        %v315 = vmul.f32 %v314, %v309
        %v316 = vadd.f32 %v315, 0.0
        %s317 = sld [smem:[#allocation2 + $0x1]]
        %v318 = vstv %s317
        %v319 = vmul.f32 %v318, %v310
        %v320 = vadd.f32 %v316, %v319
        %s321 = sld [smem:[#allocation2 + $0x2]]
        %v322 = vstv %s321
        %v323 = vmul.f32 %v322, %v311
        %v324 = vadd.f32 %v320, %v323
        %s325 = sld [smem:[#allocation2 + $0x3]]
        %v326 = vstv %s325
        %v327 = vmul.f32 %v326, %v312
        %v328 = vadd.f32 %v324, %v327
        %s329 = sld [smem:[#allocation7]]
        %v330 = vstv %s329
        %v331 = vadd.f32 %v328, %v330
        %332 = vst [vmem:[%s300] sm:$0x3] %v331
        %s333 = sld [smem:[#allocation2 + $0x80]]
        %v334 = vstv %s333
        %v335 = vmul.f32 %v334, %v309
        %v336 = vadd.f32 %v335, 0.0
        %s337 = sld [smem:[#allocation2 + $0x81]]
        %v338 = vstv %s337
        %v339 = vmul.f32 %v338, %v310
        %v340 = vadd.f32 %v336, %v339
        %s341 = sld [smem:[#allocation2 + $0x82]]
        %v342 = vstv %s341
        %v343 = vmul.f32 %v342, %v311
        %v344 = vadd.f32 %v340, %v343
        %s345 = sld [smem:[#allocation2 + $0x83]]
        %v346 = vstv %s345
        %v347 = vmul.f32 %v346, %v312
        %v348 = vadd.f32 %v344, %v347
        %s349 = sld [smem:[#allocation7 + $0x1]]
        %v350 = vstv %s349
        %v351 = vadd.f32 %v348, %v350
        %s352 = scalar_lea.vmem %s300, 2 [#allocation11]
        %353 = vst [vmem:[%s352] sm:$0x3] %v351
        %s354 = sld [smem:[#allocation2 + $0x100]]
        %v355 = vstv %s354
        %v356 = vmul.f32 %v355, %v309
        %v357 = vadd.f32 %v356, 0.0
        %s358 = sld [smem:[#allocation2 + $0x101]]
        %v359 = vstv %s358
        %v360 = vmul.f32 %v359, %v310
        %v361 = vadd.f32 %v357, %v360
        %s362 = sld [smem:[#allocation2 + $0x102]]
        %v363 = vstv %s362
        %v364 = vmul.f32 %v363, %v311
        %v365 = vadd.f32 %v361, %v364
        %s366 = sld [smem:[#allocation2 + $0x103]]
        %v367 = vstv %s366
        %v368 = vmul.f32 %v367, %v312
        %v369 = vadd.f32 %v365, %v368
        %s370 = sld [smem:[#allocation7 + $0x2]]
        %v371 = vstv %s370
        %v372 = vadd.f32 %v369, %v371
        %s373 = scalar_lea.vmem %s300, 4 [#allocation11]
        %374 = vst [vmem:[%s373] sm:$0x3] %v372
        %s375 = sld [smem:[#allocation2 + $0x180]]
        %v376 = vstv %s375
        %v377 = vmul.f32 %v376, %v309
        %v378 = vadd.f32 %v377, 0.0
        %s379 = sld [smem:[#allocation2 + $0x181]]
        %v380 = vstv %s379
        %v381 = vmul.f32 %v380, %v310
        %v382 = vadd.f32 %v378, %v381
        %s383 = sld [smem:[#allocation2 + $0x182]]
        %v384 = vstv %s383
        %v385 = vmul.f32 %v384, %v311
        %v386 = vadd.f32 %v382, %v385
        %s387 = sld [smem:[#allocation2 + $0x183]]
        %v388 = vstv %s387
        %v389 = vmul.f32 %v388, %v312
        %v390 = vadd.f32 %v386, %v389
        %s391 = sld [smem:[#allocation7 + $0x3]]
        %v392 = vstv %s391
        %v393 = vadd.f32 %v390, %v392
        %s394 = scalar_lea.vmem %s300, 6 [#allocation11]
        %395 = vst [vmem:[%s394] sm:$0x3] %v393
        %s396 = sand.u32 %s146, 1
        %s397 = scalar_lea.sflag [#allocation4], %s396
        %s398 = sand.u32 %s146, 1
        %s399 = smul.addr %s398, 8
        %s400 = scalar_lea.vmem [#allocation11], %s399
        // Predicated region
        $region53: #{tpu_custom_call.1} parent=35 // pred_check
          %p401 = pneg %p156
        $region54: #{tpu_custom_call.1} parent=35 // pred_check_branch
          %403 = sbr.rel (%p401) target = $region56
        $region55: #{tpu_custom_call.1} parent=35 // pred_region
          %s405 = ssub.s32 128, 128
          %406 = vsyncadd %s397, %s405
          %s407 = smul.addr %s30, 4
          %s408 = sadd.s32 %s31, %s407
          %s409 = smul.addr %s408, 32
          %s410 = scalar_lea.hbm %s4, %s409
          %s411 = sshll.u32 %s400, 4
          %s412 = int_to_ptr.vmem [resolvable:$true] %s411
          %417 = dma.vmem_to_hbm [thread:$0]  %s412, 128, %s410, %s397, 32, 32, 2
        $region56: #{tpu_custom_call.1} parent=35 // pred_fallthru
          _
      $region36: #{tpu_custom_call.1} parent=5 // pred_fallthru
        _
      %p418 = scmp.le.s32.totalorder 2, %s21
      // Predicated region
      $region57: #{tpu_custom_call.1} parent=5 // pred_check
        %p419 = pneg %p418
      $region58: #{tpu_custom_call.1} parent=5 // pred_check_branch
        %421 = sbr.rel (%p419) target = $region60
      $region59: #{tpu_custom_call.1} parent=5 // pred_region
        %s422 = ssub.s32 %s21, 2
        // Predicated region
        $region61: #{tpu_custom_call.1} parent=59 // pred_check
          %p423 = pneg %p162
        $region62: #{tpu_custom_call.1} parent=59 // pred_check_branch
          %425 = sbr.rel (%p423) target = $region64
        $region63: #{tpu_custom_call.1} parent=59 // pred_region
          %s426 = sand.u32 %s147, 1
          %s427 = scalar_lea.sflag [#allocation4], %s426
          %s428 = sand.u32 %s147, 1
          %s429 = smul.addr %s428, 8
          %s430 = scalar_lea.vmem [#allocation11], %s429
          %431 = dma.done %s427, 128
        $region64: #{tpu_custom_call.1} parent=59 // pred_fallthru
          _
      $region60: #{tpu_custom_call.1} parent=5 // pred_fallthru
        _
    $region6: #{tpu_custom_call.1} parent=1 // loop_footer
      %s25 = sadd.s32 1, %s21
    $region7: #{tpu_custom_call.1} parent=1 // loop_footer_branch
      %20 = sbr.rel target = $region3
    $region8: #{tpu_custom_call.1} parent=1 // loop_exit
      _
    %432 = vsyncpa [#allocation3], 1
    %s433 = scalar_lea.sflag [#allocation3], 1
    %434 = vsyncpa %s433, 1
    %435 = vsyncpa [#allocation10], 1
    %s436 = scalar_lea.sflag [#allocation10], 1
    %437 = vsyncpa %s436, 1
    %438 = vsyncpa [#allocation4], 1
    %s439 = scalar_lea.sflag [#allocation4], 1
    %440 = vsyncpa %s439, 1
    %441 = vsyncpa [#allocation5], 1
    %s442 = scalar_lea.sflag [#allocation5], 1
    %443 = vsyncpa %s442, 1
    %444 = vsyncpa [#allocation6], 1
    %s445 = scalar_lea.sflag [#allocation6], 1
    %446 = vsyncpa %s445, 1

</llo_original>
